<compile_context>
chip_gen: v7x
topology: tpu7x:2x2x1
jax: 0.10.0
libtpu: 0.0.40
codegen_flags: <defaults>
</compile_context>

<pallas_src>
import jax
import jax.numpy as jnp
from jax.experimental import pallas as pl
from jax.experimental.pallas import tpu as pltpu


def decoder_kernel(zt_ref, w1_ref, b1_ref, w2_ref, b2_ref, w3_ref, b3_ref,
                   c0_ref, c1_ref, ot_ref):
    # h1^T = relu(W1 @ z^T + b1):  (64, L) @ (L, tb) -> (64, tb)
    h1 = jnp.dot(w1_ref[...], zt_ref[...], preferred_element_type=jnp.float32)
    h1 = jnp.maximum(h1 + b1_ref[...], 0.0)
    # h2^T = relu(W2 @ h1^T + b2): (128, 64) @ (64, tb) -> (128, tb)
    h2 = jnp.dot(w2_ref[...], h1, preferred_element_type=jnp.float32)
    h2 = jnp.maximum(h2 + b2_ref[...], 0.0)
    # x^T  = W3 @ h2^T + b3:       (D, 128) @ (128, tb) -> (D, tb)
    x = jnp.dot(w3_ref[...], h2, preferred_element_type=jnp.float32)
    x = x + b3_ref[...]
    # bounded output: lb + (ub-lb)*sigmoid(x) == c0 + c1*tanh(x/2)
    ot_ref[...] = (c0_ref[...] + c1_ref[...] * jnp.tanh(0.5 * x)).astype(ot_ref.dtype)


def _pick_tiling(batch, target=512):
    """Return (tile_b, padded_B).

    - tile is a multiple of 128 so output stores are lane-dense (unmasked vst)
    - batches <= 256 run in a single grid step (amortize per-step overhead on
      single-TC v5e/v6e)
    - larger batches get an EVEN number of grid steps (v7x has 2 TensorCores)
      with tiles as large as possible but <= `target`
    """
    lanes = 128
    b_pad = max(lanes, ((batch + lanes - 1) // lanes) * lanes)
    if b_pad <= 2 * lanes:                      # tiny batch: one step
        return b_pad, b_pad
    target = max(lanes, (target // lanes) * lanes)
    half_steps = max(1, -(-b_pad // (2 * target)))   # ceil div
    n_steps = 2 * half_steps
    tile = -(-b_pad // n_steps)                      # ceil div
    tile = ((tile + lanes - 1) // lanes) * lanes
    return tile, tile * n_steps


def decoder_forward(z, w1, b1, w2, b2, w3, b3, lb, ub, *, target_tile=512):
    """z: (B, latent_dim) f32. Weights in PyTorch (out_features, in_features)
    layout. Returns (B, output_dim) f32."""
    B, L = z.shape
    D = w3.shape[0]

    tb, Bp = _pick_tiling(B, target_tile)

    # feature-major: batch on the lane axis
    zt = jnp.asarray(z, jnp.float32).T                  # (L, B)
    if Bp != B:
        zt = jnp.pad(zt, ((0, 0), (0, Bp - B)))

    w1f = w1.astype(jnp.float32)
    w2f = w2.astype(jnp.float32)
    w3f = w3.astype(jnp.float32)

    # biases / folded bound constants as (dim, 1) columns (broadcast over lanes)
    b1c = b1.reshape(-1, 1).astype(jnp.float32)
    b2c = b2.reshape(-1, 1).astype(jnp.float32)
    b3c = b3.reshape(-1, 1).astype(jnp.float32)
    half = 0.5 * (ub.astype(jnp.float32) - lb.astype(jnp.float32))
    c0 = (lb.astype(jnp.float32) + half).reshape(-1, 1)
    c1 = half.reshape(-1, 1)

    grid = (Bp // tb,)

    def resident(a):
        # constant index_map -> same block every step -> stays VMEM-resident
        return pl.BlockSpec(a.shape, lambda i: (0, 0))

    params = (w1f, b1c, w2f, b2c, w3f, b3c, c0, c1)
    cost = pl.CostEstimate(
        flops=2 * Bp * (L * 64 + 64 * 128 + 128 * D),
        transcendentals=Bp * D,                        # one tanh per output elem
        bytes_accessed=(zt.size * 4 + Bp * D * 4
                        + sum(a.size * 4 for a in params)),
    )

    out_t = pl.pallas_call(
        decoder_kernel,
        out_shape=jax.ShapeDtypeStruct((D, Bp), jnp.float32),
        grid_spec=pltpu.PrefetchScalarGridSpec(
            num_scalar_prefetch=0,
            grid=grid,
            in_specs=[
                pl.BlockSpec((L, tb), lambda i: (0, i)),     # z^T tile
                resident(w1f), resident(b1c),
                resident(w2f), resident(b2c),
                resident(w3f), resident(b3c),
                resident(c0), resident(c1),
            ],
            out_specs=pl.BlockSpec((D, tb), lambda i: (0, i)),
        ),
        compiler_params=pltpu.CompilerParams(
            dimension_semantics=("parallel",)),
        cost_estimate=cost,
    )(zt, w1f, b1c, w2f, b2c, w3f, b3c, c0, c1)

    # back to the module's (B, D) layout (wrapper-side layout plumbing)
    return out_t[:, :B].T


def reference_forward(z, w1, b1, w2, b2, w3, b3, lb, ub):
    # PyTorch semantics: x @ W.T + b with W of shape (out_features, in_features)
    h1 = jnp.maximum(z @ w1.T + b1, 0.0)
    h2 = jnp.maximum(h1 @ w2.T + b2, 0.0)
    x = h2 @ w3.T + b3
    return lb + (ub - lb) * jax.nn.sigmoid(x)


if __name__ == "__main__":
    # Small shapes consistent with the module; batch large enough to exercise
    # a lane-dense 256-row tile and an even 2-step parallel grid.
    batch = 512
    latent_dim = 16
    output_dim = 16

    key = jax.random.PRNGKey(0)
    ks = jax.random.split(key, 7)

    z = jax.random.normal(ks[0], (batch, latent_dim), dtype=jnp.float32)

    # Deterministic synthetic parameters in PyTorch nn.Linear layout (out, in)
    w1 = jax.random.normal(ks[1], (64, latent_dim), dtype=jnp.float32) * 0.1
    b1 = jax.random.normal(ks[2], (64,), dtype=jnp.float32) * 0.1
    w2 = jax.random.normal(ks[3], (128, 64), dtype=jnp.float32) * 0.1
    b2 = jax.random.normal(ks[4], (128,), dtype=jnp.float32) * 0.1
    w3 = jax.random.normal(ks[5], (output_dim, 128), dtype=jnp.float32) * 0.1
    b3 = jax.random.normal(ks[6], (output_dim,), dtype=jnp.float32) * 0.1

    # Per-output bounds (bounds=[(lb_i, ub_i), ...] in the PyTorch module)
    out_lb = jnp.linspace(-2.0, -1.0, output_dim, dtype=jnp.float32)
    out_ub = jnp.linspace(1.0, 3.0, output_dim, dtype=jnp.float32)

    out = decoder_forward(z, w1, b1, w2, b2, w3, b3, out_lb, out_ub)
    out = jax.block_until_ready(out)

    ref = reference_forward(z, w1, b1, w2, b2, w3, b3, out_lb, out_ub)
    assert out.shape == (batch, output_dim)
    max_err = jnp.max(jnp.abs(out - ref))
    assert jnp.allclose(out, ref, atol=1e-3, rtol=1e-3), (
        f"mismatch vs reference, max abs err = {max_err}")

    print("KERNEL_OK")
</pallas_src>

<mosaic_0001>
module attributes {stable_mosaic.version = 11 : i64} {
  func.func @decoder_kernel(%arg0: i32, %arg1: memref<16x256xf32, #tpu.memory_space<vmem>>, %arg2: memref<64x16xf32, #tpu.memory_space<vmem>>, %arg3: memref<64x1xf32, #tpu.memory_space<vmem>>, %arg4: memref<128x64xf32, #tpu.memory_space<vmem>>, %arg5: memref<128x1xf32, #tpu.memory_space<vmem>>, %arg6: memref<16x128xf32, #tpu.memory_space<vmem>>, %arg7: memref<16x1xf32, #tpu.memory_space<vmem>>, %arg8: memref<16x1xf32, #tpu.memory_space<vmem>>, %arg9: memref<16x1xf32, #tpu.memory_space<vmem>>, %arg10: memref<16x256xf32, #tpu.memory_space<vmem>>) attributes {dimension_semantics = [#tpu.dimension_semantics<parallel>], iteration_bounds = array<i64: 2>, scalar_prefetch = 0 : i64, scratch_operands = 0 : i64, tpu.core_type = #tpu.core_type<tc>, window_params = [{transform_indices = @transform_0, window_bounds = array<i64: 16, 256>}, {pipeline_mode = #tpu.pipeline_mode<synchronous>, transform_indices = @transform_1, window_bounds = array<i64: 64, 16>}, {pipeline_mode = #tpu.pipeline_mode<synchronous>, transform_indices = @transform_2, window_bounds = array<i64: 64, 1>}, {pipeline_mode = #tpu.pipeline_mode<synchronous>, transform_indices = @transform_3, window_bounds = array<i64: 128, 64>}, {pipeline_mode = #tpu.pipeline_mode<synchronous>, transform_indices = @transform_4, window_bounds = array<i64: 128, 1>}, {pipeline_mode = #tpu.pipeline_mode<synchronous>, transform_indices = @transform_5, window_bounds = array<i64: 16, 128>}, {pipeline_mode = #tpu.pipeline_mode<synchronous>, transform_indices = @transform_6, window_bounds = array<i64: 16, 1>}, {pipeline_mode = #tpu.pipeline_mode<synchronous>, transform_indices = @transform_7, window_bounds = array<i64: 16, 1>}, {pipeline_mode = #tpu.pipeline_mode<synchronous>, transform_indices = @transform_8, window_bounds = array<i64: 16, 1>}, {transform_indices = @transform_9, window_bounds = array<i64: 16, 256>}]} {
    %c0 = arith.constant 0 : index
    %c0_0 = arith.constant 0 : index
    %0 = vector.load %arg2[%c0, %c0_0] : memref<64x16xf32, #tpu.memory_space<vmem>>, vector<64x16xf32>
    %c0_1 = arith.constant 0 : index
    %c0_2 = arith.constant 0 : index
    %1 = vector.load %arg1[%c0_1, %c0_2] : memref<16x256xf32, #tpu.memory_space<vmem>>, vector<16x256xf32>
    %cst = arith.constant dense<0.000000e+00> : vector<64x256xf32>
    %2 = tpu.matmul %0, %1, %cst {dimension_numbers = #tpu.dot_dimension_numbers<[1], [0], [0], [1], [0, 0, 1, 1], [], []>} : vector<64x16xf32>, vector<16x256xf32>, vector<64x256xf32> -> vector<64x256xf32>
    %c0_3 = arith.constant 0 : index
    %c0_4 = arith.constant 0 : index
    %3 = vector.load %arg3[%c0_3, %c0_4] : memref<64x1xf32, #tpu.memory_space<vmem>>, vector<64x1xf32>
    %4 = vector.broadcast %3 : vector<64x1xf32> to vector<64x256xf32>
    %5 = arith.addf %2, %4 : vector<64x256xf32>
    %cst_5 = arith.constant 0.000000e+00 : f32
    %6 = vector.broadcast %cst_5 : f32 to vector<64x256xf32>
    %7 = arith.maximumf %5, %6 : vector<64x256xf32>
    %c0_6 = arith.constant 0 : index
    %c0_7 = arith.constant 0 : index
    %8 = vector.load %arg4[%c0_6, %c0_7] : memref<128x64xf32, #tpu.memory_space<vmem>>, vector<128x64xf32>
    %cst_8 = arith.constant dense<0.000000e+00> : vector<128x256xf32>
    %9 = tpu.matmul %8, %7, %cst_8 {dimension_numbers = #tpu.dot_dimension_numbers<[1], [0], [0], [1], [0, 0, 1, 1], [], []>} : vector<128x64xf32>, vector<64x256xf32>, vector<128x256xf32> -> vector<128x256xf32>
    %c0_9 = arith.constant 0 : index
    %c0_10 = arith.constant 0 : index
    %10 = vector.load %arg5[%c0_9, %c0_10] : memref<128x1xf32, #tpu.memory_space<vmem>>, vector<128x1xf32>
    %11 = vector.broadcast %10 : vector<128x1xf32> to vector<128x256xf32>
    %12 = arith.addf %9, %11 : vector<128x256xf32>
    %cst_11 = arith.constant 0.000000e+00 : f32
    %13 = vector.broadcast %cst_11 : f32 to vector<128x256xf32>
    %14 = arith.maximumf %12, %13 : vector<128x256xf32>
    %c0_12 = arith.constant 0 : index
    %c0_13 = arith.constant 0 : index
    %15 = vector.load %arg6[%c0_12, %c0_13] : memref<16x128xf32, #tpu.memory_space<vmem>>, vector<16x128xf32>
    %cst_14 = arith.constant dense<0.000000e+00> : vector<16x256xf32>
    %16 = tpu.matmul %15, %14, %cst_14 {dimension_numbers = #tpu.dot_dimension_numbers<[1], [0], [0], [1], [0, 0, 1, 1], [], []>} : vector<16x128xf32>, vector<128x256xf32>, vector<16x256xf32> -> vector<16x256xf32>
    %c0_15 = arith.constant 0 : index
    %c0_16 = arith.constant 0 : index
    %17 = vector.load %arg7[%c0_15, %c0_16] : memref<16x1xf32, #tpu.memory_space<vmem>>, vector<16x1xf32>
    %18 = vector.broadcast %17 : vector<16x1xf32> to vector<16x256xf32>
    %19 = arith.addf %16, %18 : vector<16x256xf32>
    %c0_17 = arith.constant 0 : index
    %c0_18 = arith.constant 0 : index
    %20 = vector.load %arg8[%c0_17, %c0_18] : memref<16x1xf32, #tpu.memory_space<vmem>>, vector<16x1xf32>
    %c0_19 = arith.constant 0 : index
    %c0_20 = arith.constant 0 : index
    %21 = vector.load %arg9[%c0_19, %c0_20] : memref<16x1xf32, #tpu.memory_space<vmem>>, vector<16x1xf32>
    %cst_21 = arith.constant 5.000000e-01 : f32
    %22 = vector.broadcast %cst_21 : f32 to vector<16x256xf32>
    %23 = arith.mulf %22, %19 : vector<16x256xf32>
    %24 = math.tanh %23 : vector<16x256xf32>
    %25 = vector.broadcast %21 : vector<16x1xf32> to vector<16x256xf32>
    %26 = arith.mulf %25, %24 : vector<16x256xf32>
    %27 = vector.broadcast %20 : vector<16x1xf32> to vector<16x256xf32>
    %28 = arith.addf %27, %26 : vector<16x256xf32>
    %c0_22 = arith.constant 0 : index
    %c0_23 = arith.constant 0 : index
    %29 = vector.load %arg10[%c0_22, %c0_23] : memref<16x256xf32, #tpu.memory_space<vmem>>, vector<16x256xf32>
    tpu.vector_store %arg10[%c0_22, %c0_23], %28 {strides = array<i32>} : memref<16x256xf32, #tpu.memory_space<vmem>>, vector<16x256xf32>,
    return
  }
  func.func @transform_0(%arg0: i32) -> (i32, i32) {
    %c0_i32 = arith.constant 0 : i32
    %c0_i32_0 = arith.constant 0 : i32
    return %c0_i32, %arg0 : i32, i32
  }
  func.func @transform_1(%arg0: i32) -> (i32, i32) {
    %c0_i32 = arith.constant 0 : i32
    %c0_i32_0 = arith.constant 0 : i32
    %c0_i32_1 = arith.constant 0 : i32
    return %c0_i32, %c0_i32_0 : i32, i32
  }
  func.func @transform_2(%arg0: i32) -> (i32, i32) {
    %c0_i32 = arith.constant 0 : i32
    %c0_i32_0 = arith.constant 0 : i32
    %c0_i32_1 = arith.constant 0 : i32
    return %c0_i32, %c0_i32_0 : i32, i32
  }
  func.func @transform_3(%arg0: i32) -> (i32, i32) {
    %c0_i32 = arith.constant 0 : i32
    %c0_i32_0 = arith.constant 0 : i32
    %c0_i32_1 = arith.constant 0 : i32
    return %c0_i32, %c0_i32_0 : i32, i32
  }
  func.func @transform_4(%arg0: i32) -> (i32, i32) {
    %c0_i32 = arith.constant 0 : i32
    %c0_i32_0 = arith.constant 0 : i32
    %c0_i32_1 = arith.constant 0 : i32
    return %c0_i32, %c0_i32_0 : i32, i32
  }
  func.func @transform_5(%arg0: i32) -> (i32, i32) {
    %c0_i32 = arith.constant 0 : i32
    %c0_i32_0 = arith.constant 0 : i32
    %c0_i32_1 = arith.constant 0 : i32
    return %c0_i32, %c0_i32_0 : i32, i32
  }
  func.func @transform_6(%arg0: i32) -> (i32, i32) {
    %c0_i32 = arith.constant 0 : i32
    %c0_i32_0 = arith.constant 0 : i32
    %c0_i32_1 = arith.constant 0 : i32
    return %c0_i32, %c0_i32_0 : i32, i32
  }
  func.func @transform_7(%arg0: i32) -> (i32, i32) {
    %c0_i32 = arith.constant 0 : i32
    %c0_i32_0 = arith.constant 0 : i32
    %c0_i32_1 = arith.constant 0 : i32
    return %c0_i32, %c0_i32_0 : i32, i32
  }
  func.func @transform_8(%arg0: i32) -> (i32, i32) {
    %c0_i32 = arith.constant 0 : i32
    %c0_i32_0 = arith.constant 0 : i32
    %c0_i32_1 = arith.constant 0 : i32
    return %c0_i32, %c0_i32_0 : i32, i32
  }
  func.func @transform_9(%arg0: i32) -> (i32, i32) {
    %c0_i32 = arith.constant 0 : i32
    %c0_i32_0 = arith.constant 0 : i32
    return %c0_i32, %arg0 : i32, i32
  }
}

</mosaic_0001>

<llo_original>
// kernel: tpu_custom_call.1
$region0: #{tpu_custom_call.1}
  #allocation0 [shape = 'u32[]', space=smem, size = 0x4, offset = 0x4, fixed_abs, tag = 'smem constant byte address 0x4 - core index']
  #allocation1 [shape = 'u32[144,128]{1,0:T(1,128)}', space=vmem, size = 0x12000, scoped, tag = 'internal scratch']
  %s0 = inlined_call_operand.vmem [shape: f32[16,512], index: 0, kind: input, shape index: {}]
  %s1 = inlined_call_operand.vmem [shape: f32[64,16], index: 1, kind: input, shape index: {}]
  %s2 = inlined_call_operand.vmem [shape: f32[64,1], index: 2, kind: input, shape index: {}]
  %s3 = inlined_call_operand.vmem [shape: f32[128,64], index: 3, kind: input, shape index: {}]
  %s4 = inlined_call_operand.vmem [shape: f32[128,1], index: 4, kind: input, shape index: {}]
  %s5 = inlined_call_operand.vmem [shape: f32[16,128], index: 5, kind: input, shape index: {}]
  %s6 = inlined_call_operand.vmem [shape: f32[16,1], index: 6, kind: input, shape index: {}]
  %s7 = inlined_call_operand.vmem [shape: f32[16,1], index: 7, kind: input, shape index: {}]
  %s8 = inlined_call_operand.vmem [shape: f32[16,1], index: 8, kind: input, shape index: {}]
  %s9 = inlined_call_operand.hbm [shape: f32[16,512], index: 9, kind: output, shape index: {}]
  %s10 = sld [smem:[#allocation0]]
  $region92: #{tpu_custom_call.1} parent=0
    _
  %s12 = ssub.s32 1, %s10
  %s13 = scalar_select 0, %s12, %s10
  $region1: #{tpu_custom_call.1} parent=0
    #allocation2 [shape = 'u8[32768]{0}', space=vmem, size = 0x8000, scoped, tag = 'input window, operand 0']
    #allocation3 [shape = 'u8[32768]{0}', space=vmem, size = 0x8000, scoped, tag = 'output window, operand 0']
    #allocation4 [shape = 's32[2]{0}', space=sflag, size = 0x8, scoped, tag = 'scoped memory for tpu_custom_call.1']
    %14 = vsyncpa [#allocation4], 0
    %s15 = scalar_lea.sflag [#allocation4], 1
    %16 = vsyncpa %s15, 0
    loop: start=0, step=1, limit=4
    $region2: #{tpu_custom_call.1} parent=1 // loop_pre_header
      _
    $region3: #{tpu_custom_call.1} parent=1 // loop_header
      %s18 = sphi 0, %s22
      %p19 = scmp.ge.s32.totalorder %s18, 4
      %s28 = sphi 0, %s30
      %s31 = sphi 0, %s28
      %s32 = sphi 0, %s31
      %s48 = sphi 0, %s32
      %s52 = sphi 0, %s52
      %s54 = sphi 0, %s52
      %s55 = sphi 0, %s54
      %s69 = sphi 0, %s55
      %s73 = sphi 0, %s73
      %s75 = sphi 0, %s73
      %s76 = sphi 0, %s75
      %s90 = sphi 0, %s76
      %s94 = sphi 0, %s94
      %s96 = sphi 0, %s94
      %s97 = sphi 0, %s96
      %s111 = sphi 0, %s97
      %s115 = sphi 0, %s115
      %s117 = sphi 0, %s115
      %s118 = sphi 0, %s117
      %s132 = sphi 0, %s118
      %s136 = sphi 0, %s136
      %s138 = sphi 0, %s136
      %s139 = sphi 0, %s138
      %s153 = sphi 0, %s139
      %s157 = sphi 0, %s157
      %s159 = sphi 0, %s157
      %s160 = sphi 0, %s159
      %s174 = sphi 0, %s160
      %s178 = sphi 0, %s178
      %s180 = sphi 0, %s178
      %s181 = sphi 0, %s180
      %s195 = sphi 0, %s181
      %s199 = sphi 0, %s199
      %s201 = sphi 0, %s199
      %s202 = sphi 0, %s201
      %s216 = sphi 0, %s202
      %s222 = sphi 0, %s224
      %s225 = sphi 0, %s222
      %s226 = sphi 0, %s225
      %s242 = sphi 0, %s226
    $region4: #{tpu_custom_call.1} parent=1 // loop_header_branch
      %21 = sbr.rel (%p19) target = $region8
    $region5: #{tpu_custom_call.1} parent=1 // loop_body
      %s23 = ssub.s32 %s18, 1
      %s24 = ssub.s32 %s18, 2
      %s25 = sadd.s32 %s18, 1
      %s26 = ssub.s32 %s18, %s25
      %p27 = scmp.eq.s32.totalorder %s26, 0
      %s29 = sadd.s32 %s28, 1
      %s30 = scalar_select %p27, %s28, %s29
      %p33 = pneg %p27
      %p34 = scmp.eq.s32.totalorder %s18, 1
      %p35 = por %p33, %p34
      %p36 = scmp.ne.s32.totalorder %s28, %s31
      %p37 = scmp.eq.s32.totalorder %s18, 0
      %p38 = por %p36, %p37
      %p39 = scmp.ne.s32.totalorder %s28, %s31
      %p40 = scmp.eq.s32.totalorder %s23, 1
      %p41 = por %p39, %p40
      %p42 = scmp.ne.s32.totalorder %s31, %s32
      %p43 = scmp.eq.s32.totalorder %s23, 0
      %p44 = por %p42, %p43
      %p45 = scmp.ne.s32.totalorder %s31, %s32
      %p46 = scmp.eq.s32.totalorder %s24, 1
      %p47 = por %p45, %p46
      %p49 = scmp.ne.s32.totalorder %s32, %s48
      %p50 = scmp.eq.s32.totalorder %s24, 0
      %p51 = por %p49, %p50
      %s53 = sadd.s32 %s52, 1
      %p56 = scmp.eq.s32.totalorder %s18, 1
      %p57 = scmp.ne.s32.totalorder %s52, %s54
      %p58 = scmp.eq.s32.totalorder %s18, 0
      %p59 = por %p57, %p58
      %p60 = scmp.ne.s32.totalorder %s52, %s54
      %p61 = scmp.eq.s32.totalorder %s23, 1
      %p62 = por %p60, %p61
      %p63 = scmp.ne.s32.totalorder %s54, %s55
      %p64 = scmp.eq.s32.totalorder %s23, 0
      %p65 = por %p63, %p64
      %p66 = scmp.ne.s32.totalorder %s54, %s55
      %p67 = scmp.eq.s32.totalorder %s24, 1
      %p68 = por %p66, %p67
      %p70 = scmp.ne.s32.totalorder %s55, %s69
      %p71 = scmp.eq.s32.totalorder %s24, 0
      %p72 = por %p70, %p71
      %s74 = sadd.s32 %s73, 1
      %p77 = scmp.eq.s32.totalorder %s18, 1
      %p78 = scmp.ne.s32.totalorder %s73, %s75
      %p79 = scmp.eq.s32.totalorder %s18, 0
      %p80 = por %p78, %p79
      %p81 = scmp.ne.s32.totalorder %s73, %s75
      %p82 = scmp.eq.s32.totalorder %s23, 1
      %p83 = por %p81, %p82
      %p84 = scmp.ne.s32.totalorder %s75, %s76
      %p85 = scmp.eq.s32.totalorder %s23, 0
      %p86 = por %p84, %p85
      %p87 = scmp.ne.s32.totalorder %s75, %s76
      %p88 = scmp.eq.s32.totalorder %s24, 1
      %p89 = por %p87, %p88
      %p91 = scmp.ne.s32.totalorder %s76, %s90
      %p92 = scmp.eq.s32.totalorder %s24, 0
      %p93 = por %p91, %p92
      %s95 = sadd.s32 %s94, 1
      %p98 = scmp.eq.s32.totalorder %s18, 1
      %p99 = scmp.ne.s32.totalorder %s94, %s96
      %p100 = scmp.eq.s32.totalorder %s18, 0
      %p101 = por %p99, %p100
      %p102 = scmp.ne.s32.totalorder %s94, %s96
      %p103 = scmp.eq.s32.totalorder %s23, 1
      %p104 = por %p102, %p103
      %p105 = scmp.ne.s32.totalorder %s96, %s97
      %p106 = scmp.eq.s32.totalorder %s23, 0
      %p107 = por %p105, %p106
      %p108 = scmp.ne.s32.totalorder %s96, %s97
      %p109 = scmp.eq.s32.totalorder %s24, 1
      %p110 = por %p108, %p109
      %p112 = scmp.ne.s32.totalorder %s97, %s111
      %p113 = scmp.eq.s32.totalorder %s24, 0
      %p114 = por %p112, %p113
      %s116 = sadd.s32 %s115, 1
      %p119 = scmp.eq.s32.totalorder %s18, 1
      %p120 = scmp.ne.s32.totalorder %s115, %s117
      %p121 = scmp.eq.s32.totalorder %s18, 0
      %p122 = por %p120, %p121
      %p123 = scmp.ne.s32.totalorder %s115, %s117
      %p124 = scmp.eq.s32.totalorder %s23, 1
      %p125 = por %p123, %p124
      %p126 = scmp.ne.s32.totalorder %s117, %s118
      %p127 = scmp.eq.s32.totalorder %s23, 0
      %p128 = por %p126, %p127
      %p129 = scmp.ne.s32.totalorder %s117, %s118
      %p130 = scmp.eq.s32.totalorder %s24, 1
      %p131 = por %p129, %p130
      %p133 = scmp.ne.s32.totalorder %s118, %s132
      %p134 = scmp.eq.s32.totalorder %s24, 0
      %p135 = por %p133, %p134
      %s137 = sadd.s32 %s136, 1
      %p140 = scmp.eq.s32.totalorder %s18, 1
      %p141 = scmp.ne.s32.totalorder %s136, %s138
      %p142 = scmp.eq.s32.totalorder %s18, 0
      %p143 = por %p141, %p142
      %p144 = scmp.ne.s32.totalorder %s136, %s138
      %p145 = scmp.eq.s32.totalorder %s23, 1
      %p146 = por %p144, %p145
      %p147 = scmp.ne.s32.totalorder %s138, %s139
      %p148 = scmp.eq.s32.totalorder %s23, 0
      %p149 = por %p147, %p148
      %p150 = scmp.ne.s32.totalorder %s138, %s139
      %p151 = scmp.eq.s32.totalorder %s24, 1
      %p152 = por %p150, %p151
      %p154 = scmp.ne.s32.totalorder %s139, %s153
      %p155 = scmp.eq.s32.totalorder %s24, 0
      %p156 = por %p154, %p155
      %s158 = sadd.s32 %s157, 1
      %p161 = scmp.eq.s32.totalorder %s18, 1
      %p162 = scmp.ne.s32.totalorder %s157, %s159
      %p163 = scmp.eq.s32.totalorder %s18, 0
      %p164 = por %p162, %p163
      %p165 = scmp.ne.s32.totalorder %s157, %s159
      %p166 = scmp.eq.s32.totalorder %s23, 1
      %p167 = por %p165, %p166
      %p168 = scmp.ne.s32.totalorder %s159, %s160
      %p169 = scmp.eq.s32.totalorder %s23, 0
      %p170 = por %p168, %p169
      %p171 = scmp.ne.s32.totalorder %s159, %s160
      %p172 = scmp.eq.s32.totalorder %s24, 1
      %p173 = por %p171, %p172
      %p175 = scmp.ne.s32.totalorder %s160, %s174
      %p176 = scmp.eq.s32.totalorder %s24, 0
      %p177 = por %p175, %p176
      %s179 = sadd.s32 %s178, 1
      %p182 = scmp.eq.s32.totalorder %s18, 1
      %p183 = scmp.ne.s32.totalorder %s178, %s180
      %p184 = scmp.eq.s32.totalorder %s18, 0
      %p185 = por %p183, %p184
      %p186 = scmp.ne.s32.totalorder %s178, %s180
      %p187 = scmp.eq.s32.totalorder %s23, 1
      %p188 = por %p186, %p187
      %p189 = scmp.ne.s32.totalorder %s180, %s181
      %p190 = scmp.eq.s32.totalorder %s23, 0
      %p191 = por %p189, %p190
      %p192 = scmp.ne.s32.totalorder %s180, %s181
      %p193 = scmp.eq.s32.totalorder %s24, 1
      %p194 = por %p192, %p193
      %p196 = scmp.ne.s32.totalorder %s181, %s195
      %p197 = scmp.eq.s32.totalorder %s24, 0
      %p198 = por %p196, %p197
      %s200 = sadd.s32 %s199, 1
      %p203 = scmp.eq.s32.totalorder %s18, 1
      %p204 = scmp.ne.s32.totalorder %s199, %s201
      %p205 = scmp.eq.s32.totalorder %s18, 0
      %p206 = por %p204, %p205
      %p207 = scmp.ne.s32.totalorder %s199, %s201
      %p208 = scmp.eq.s32.totalorder %s23, 1
      %p209 = por %p207, %p208
      %p210 = scmp.ne.s32.totalorder %s201, %s202
      %p211 = scmp.eq.s32.totalorder %s23, 0
      %p212 = por %p210, %p211
      %p213 = scmp.ne.s32.totalorder %s201, %s202
      %p214 = scmp.eq.s32.totalorder %s24, 1
      %p215 = por %p213, %p214
      %p217 = scmp.ne.s32.totalorder %s202, %s216
      %p218 = scmp.eq.s32.totalorder %s24, 0
      %p219 = por %p217, %p218
      %s220 = ssub.s32 %s18, %s25
      %p221 = scmp.eq.s32.totalorder %s220, 0
      %s223 = sadd.s32 %s222, 1
      %s224 = scalar_select %p221, %s222, %s223
      %p227 = pneg %p221
      %p228 = scmp.eq.s32.totalorder %s18, 1
      %p229 = por %p227, %p228
      %p230 = scmp.ne.s32.totalorder %s222, %s225
      %p231 = scmp.eq.s32.totalorder %s18, 0
      %p232 = por %p230, %p231
      %p233 = scmp.ne.s32.totalorder %s222, %s225
      %p234 = scmp.eq.s32.totalorder %s23, 1
      %p235 = por %p233, %p234
      %p236 = scmp.ne.s32.totalorder %s225, %s226
      %p237 = scmp.eq.s32.totalorder %s23, 0
      %p238 = por %p236, %p237
      %p239 = scmp.ne.s32.totalorder %s225, %s226
      %p240 = scmp.eq.s32.totalorder %s24, 1
      %p241 = por %p239, %p240
      %p243 = scmp.ne.s32.totalorder %s226, %s242
      %p244 = scmp.eq.s32.totalorder %s24, 0
      %p245 = por %p243, %p244
      %p246 = scmp.le.s32.totalorder 1, %s18
      %p247 = scmp.lt.s32.totalorder %s18, 3
      %p248 = pnand %p246, %p247
      %p249 = pneg %p248
      // Predicated region
      $region9: #{tpu_custom_call.1} parent=5 // pred_check
        _
      $region10: #{tpu_custom_call.1} parent=5 // pred_check_branch
        %251 = sbr.rel (%p248) target = $region12
      $region11: #{tpu_custom_call.1} parent=5 // pred_region
        %s252 = ssub.s32 %s18, 1
        // Predicated region
        $region13: #{tpu_custom_call.1} parent=11 // pred_check
          %p253 = pneg %p65
        $region14: #{tpu_custom_call.1} parent=11 // pred_check_branch
          %255 = sbr.rel (%p253) target = $region16
        $region15: #{tpu_custom_call.1} parent=11 // pred_region
          _
        $region16: #{tpu_custom_call.1} parent=11 // pred_fallthru
          _
        // Predicated region
        $region17: #{tpu_custom_call.1} parent=11 // pred_check
          %p256 = pneg %p86
        $region18: #{tpu_custom_call.1} parent=11 // pred_check_branch
          %258 = sbr.rel (%p256) target = $region20
        $region19: #{tpu_custom_call.1} parent=11 // pred_region
          _
        $region20: #{tpu_custom_call.1} parent=11 // pred_fallthru
          _
        // Predicated region
        $region21: #{tpu_custom_call.1} parent=11 // pred_check
          %p259 = pneg %p107
        $region22: #{tpu_custom_call.1} parent=11 // pred_check_branch
          %261 = sbr.rel (%p259) target = $region24
        $region23: #{tpu_custom_call.1} parent=11 // pred_region
          _
        $region24: #{tpu_custom_call.1} parent=11 // pred_fallthru
          _
        // Predicated region
        $region25: #{tpu_custom_call.1} parent=11 // pred_check
          %p262 = pneg %p128
        $region26: #{tpu_custom_call.1} parent=11 // pred_check_branch
          %264 = sbr.rel (%p262) target = $region28
        $region27: #{tpu_custom_call.1} parent=11 // pred_region
          _
        $region28: #{tpu_custom_call.1} parent=11 // pred_fallthru
          _
        // Predicated region
        $region29: #{tpu_custom_call.1} parent=11 // pred_check
          %p265 = pneg %p149
        $region30: #{tpu_custom_call.1} parent=11 // pred_check_branch
          %267 = sbr.rel (%p265) target = $region32
        $region31: #{tpu_custom_call.1} parent=11 // pred_region
          _
        $region32: #{tpu_custom_call.1} parent=11 // pred_fallthru
          _
        // Predicated region
        $region33: #{tpu_custom_call.1} parent=11 // pred_check
          %p268 = pneg %p170
        $region34: #{tpu_custom_call.1} parent=11 // pred_check_branch
          %270 = sbr.rel (%p268) target = $region36
        $region35: #{tpu_custom_call.1} parent=11 // pred_region
          _
        $region36: #{tpu_custom_call.1} parent=11 // pred_fallthru
          _
        // Predicated region
        $region37: #{tpu_custom_call.1} parent=11 // pred_check
          %p271 = pneg %p191
        $region38: #{tpu_custom_call.1} parent=11 // pred_check_branch
          %273 = sbr.rel (%p271) target = $region40
        $region39: #{tpu_custom_call.1} parent=11 // pred_region
          _
        $region40: #{tpu_custom_call.1} parent=11 // pred_fallthru
          _
        // Predicated region
        $region41: #{tpu_custom_call.1} parent=11 // pred_check
          %p274 = pneg %p212
        $region42: #{tpu_custom_call.1} parent=11 // pred_check_branch
          %276 = sbr.rel (%p274) target = $region44
        $region43: #{tpu_custom_call.1} parent=11 // pred_region
          _
        $region44: #{tpu_custom_call.1} parent=11 // pred_fallthru
          _
      $region12: #{tpu_custom_call.1} parent=5 // pred_fallthru
        _
      %p277 = scmp.lt.s32.totalorder %s18, 2
      // Predicated region
      $region45: #{tpu_custom_call.1} parent=5 // pred_check
        %p278 = pneg %p277
      $region46: #{tpu_custom_call.1} parent=5 // pred_check_branch
        %280 = sbr.rel (%p278) target = $region48
      $region47: #{tpu_custom_call.1} parent=5 // pred_region
        // Predicated region
        $region49: #{tpu_custom_call.1} parent=47 // pred_check
          %p281 = pneg %p38
        $region50: #{tpu_custom_call.1} parent=47 // pred_check_branch
          %283 = sbr.rel (%p281) target = $region52
        $region51: #{tpu_custom_call.1} parent=47 // pred_region
          %s284 = sand.u32 %s28, 1
          %s285 = sand.u32 %s28, 1
          %s286 = smul.addr %s285, 32
          %s287 = scalar_lea.vmem [#allocation2], %s286
          %s288 = smul.u32 2, %s18
          %s289 = smul.addr %s288, 8
          %s290 = scalar_lea.vmem %s0, %s289
          // Predicated region
          $region53: #{tpu_custom_call.1} parent=51 // pred_check
            _
          $region54: #{tpu_custom_call.1} parent=51 // pred_check_branch
            %292 = sbr.rel (0) target = $region56
          $region55: #{tpu_custom_call.1} parent=51 // pred_region
            // Predicated region
            $region57: #{tpu_custom_call.1} parent=55 // pred_check
              _
            $region58: #{tpu_custom_call.1} parent=55 // pred_check_branch
              %294 = sbr.rel (0) target = $region60
            $region59: #{tpu_custom_call.1} parent=55 // pred_region
              loop: start=0, step=1, limit=1
              $region61: #{tpu_custom_call.1} parent=59 // loop_pre_header
                _
              $region62: #{tpu_custom_call.1} parent=59 // loop_header
                %s296 = sphi 0, %s300
                %p297 = scmp.ge.s32.totalorder %s296, 1
                %s301 = sphi %s290, %s290
                %s302 = sphi %s287, %s287
              $region63: #{tpu_custom_call.1} parent=59 // loop_header_branch
                %299 = sbr.rel (%p297) target = $region67
              $region64: #{tpu_custom_call.1} parent=59 // loop_body
                %v303 = vld [vmem:[%s301] sm:$0xff]
                %304 = vst [vmem:[%s302] sm:$0xff] %v303
                %v305 = vld [vmem:[%s301 + $0x8] sm:$0xff]
                %306 = vst [vmem:[%s302 + $0x8] sm:$0xff] %v305
                %v307 = vld [vmem:[%s301 + $0x20] sm:$0xff]
                %308 = vst [vmem:[%s302 + $0x10] sm:$0xff] %v307
                %v309 = vld [vmem:[%s301 + $0x28] sm:$0xff]
                %310 = vst [vmem:[%s302 + $0x18] sm:$0xff] %v309
              $region65: #{tpu_custom_call.1} parent=59 // loop_footer
                %s300 = sadd.s32 1, %s296
              $region66: #{tpu_custom_call.1} parent=59 // loop_footer_branch
                %295 = sbr.rel target = $region62
              $region67: #{tpu_custom_call.1} parent=59 // loop_exit
                _
            $region60: #{tpu_custom_call.1} parent=55 // pred_fallthru
              _
            // Predicated region
            $region68: #{tpu_custom_call.1} parent=55 // pred_check
              _
            $region69: #{tpu_custom_call.1} parent=55 // pred_check_branch
              %312 = sbr.rel target = $region71
            $region70: #{tpu_custom_call.1} parent=55 // pred_region
              _
            $region71: #{tpu_custom_call.1} parent=55 // pred_fallthru
              _
          $region56: #{tpu_custom_call.1} parent=51 // pred_fallthru
            _
          %313 = vnop
        $region52: #{tpu_custom_call.1} parent=47 // pred_fallthru
          _
      $region48: #{tpu_custom_call.1} parent=5 // pred_fallthru
        _
      %p314 = scmp.le.s32.totalorder 1, %s18
      %p315 = scmp.lt.s32.totalorder %s18, 3
      %p316 = pnand %p314, %p315
      %p317 = pneg %p316
      // Predicated region
      $region72: #{tpu_custom_call.1} parent=5 // pred_check
        _
      $region73: #{tpu_custom_call.1} parent=5 // pred_check_branch
        %319 = sbr.rel (%p316) target = $region75
      $region74: #{tpu_custom_call.1} parent=5 // pred_region
        %s320 = ssub.s32 %s18, 1
        %s321 = sand.u32 %s31, 1
        %s322 = sand.u32 %s31, 1
        %s323 = smul.addr %s322, 32
        %s324 = scalar_lea.vmem [#allocation2], %s323
        // Predicated region
        $region76: #{tpu_custom_call.1} parent=74 // pred_check
          %p325 = pneg %p44
        $region77: #{tpu_custom_call.1} parent=74 // pred_check_branch
          %327 = sbr.rel (%p325) target = $region79
        $region78: #{tpu_custom_call.1} parent=74 // pred_region
          _
        $region79: #{tpu_custom_call.1} parent=74 // pred_fallthru
          _
        %s328 = sand.u32 %s31, 1
        %s329 = sand.u32 %s31, 1
        %s330 = smul.addr %s329, 32
        %s331 = scalar_lea.vmem [#allocation2], %s330
        %p332 = pneg %p44
        %p333 = pneg %p41
        %p334 = pneg %p65
        %p335 = pneg %p62
        %p336 = pneg %p86
        %p337 = pneg %p83
        %p338 = pneg %p107
        %p339 = pneg %p104
        %p340 = pneg %p128
        %p341 = pneg %p125
        %p342 = pneg %p149
        %p343 = pneg %p146
        %p344 = pneg %p170
        %p345 = pneg %p167
        %p346 = pneg %p191
        %p347 = pneg %p188
        %p348 = pneg %p212
        %p349 = pneg %p209
        %p350 = pneg %p238
        %p351 = pneg %p235
        %s352 = sand.u32 %s225, 1
        %s353 = scalar_lea.sflag [#allocation4], %s352
        %s354 = sand.u32 %s225, 1
        %s355 = smul.addr %s354, 32
        %s356 = scalar_lea.vmem [#allocation3], %s355
        %s357 = smul.u32 2, %s23
        %s358 = smul.u32 2, %s23
        %v359 = vld [vmem:[%s1] sm:$0xff]
        %v360 = vld [vmem:[%s1 + $0x8] sm:$0xff]
        %v361 = vld [vmem:[%s1 + $0x10] sm:$0xff]
        %v362 = vld [vmem:[%s1 + $0x18] sm:$0xff]
        %v363 = vld [vmem:[%s1 + $0x20] sm:$0xff]
        %v364 = vld [vmem:[%s1 + $0x28] sm:$0xff]
        %v365 = vld [vmem:[%s1 + $0x30] sm:$0xff]
        %v366 = vld [vmem:[%s1 + $0x38] sm:$0xff]
        %v367 = vld [vmem:[%s324] sm:$0xff]
        %v368 = vld [vmem:[%s324 + $0x8] sm:$0xff]
        %v369 = vld [vmem:[%s324 + $0x10] sm:$0xff]
        %v370 = vld [vmem:[%s324 + $0x18] sm:$0xff]
        %v371 = vld [vmem:[%s2] sm:$0xff]
        %v372 = vld [vmem:[%s2 + $0x8] sm:$0xff]
        %v373 = vld [vmem:[%s2 + $0x10] sm:$0xff]
        %v374 = vld [vmem:[%s2 + $0x18] sm:$0xff]
        %v375 = vld [vmem:[%s2 + $0x20] sm:$0xff]
        %v376 = vld [vmem:[%s2 + $0x28] sm:$0xff]
        %v377 = vld [vmem:[%s2 + $0x30] sm:$0xff]
        %v378 = vld [vmem:[%s2 + $0x38] sm:$0xff]
        %380 = vset.pattern.permute.xlu0 0
        %381 = vperm.xlu0 %380, %v371
        %v382 = vpop.permute.xlu0 %381
        %385 = vset.pattern.permute.xlu0 0
        %386 = vperm.xlu0 %385, %v372
        %v387 = vpop.permute.xlu0 %386
        %390 = vset.pattern.permute.xlu0 0
        %391 = vperm.xlu0 %390, %v373
        %v392 = vpop.permute.xlu0 %391
        %395 = vset.pattern.permute.xlu0 0
        %396 = vperm.xlu0 %395, %v374
        %v397 = vpop.permute.xlu0 %396
        %400 = vset.pattern.permute.xlu0 0
        %401 = vperm.xlu0 %400, %v375
        %v402 = vpop.permute.xlu0 %401
        %405 = vset.pattern.permute.xlu0 0
        %406 = vperm.xlu0 %405, %v376
        %v407 = vpop.permute.xlu0 %406
        %410 = vset.pattern.permute.xlu0 0
        %411 = vperm.xlu0 %410, %v377
        %v412 = vpop.permute.xlu0 %411
        %415 = vset.pattern.permute.xlu0 0
        %416 = vperm.xlu0 %415, %v378
        %v417 = vpop.permute.xlu0 %416
        %vm419 = vcmask 130048
        %v421 = vsel %vm419, %v359, 0
        %v424 = vsel %vm419, %v360, 0
        %v427 = vsel %vm419, %v361, 0
        %v430 = vsel %vm419, %v362, 0
        %v433 = vsel %vm419, %v363, 0
        %v436 = vsel %vm419, %v364, 0
        %v439 = vsel %vm419, %v365, 0
        %v442 = vsel %vm419, %v366, 0
        %444 = vmatprep.subr.mxu0 %v368
        %445 = vmatpush1.msra.mxu0 %v367
        %446 = vmatprep.subr.mxu0 %v370
        %447 = vmatpush1.msra.mxu0 %v369
        %448 = vmatprep.subr.mxu0 0.0
        %449 = vmatpush1.msra.mxu0 0.0
        %450 = vmatprep.subr.mxu0 0.0
        %451 = vmatpush1.msra.mxu0 0.0
        %452 = vmatprep.subr.mxu0 0.0
        %453 = vmatpush1.msra.mxu0 0.0
        %454 = vmatprep.subr.mxu0 0.0
        %455 = vmatpush1.msra.mxu0 0.0
        %456 = vmatprep.subr.mxu0 0.0
        %457 = vmatpush1.msra.mxu0 0.0
        %458 = vmatprep.subr.mxu0 0.0
        %459 = vmatpush1.msra.mxu0 0.0
        %460 = vmatprep.subr.mxu0 0.0
        %461 = vmatpush1.msra.mxu0 0.0
        %462 = vmatprep.subr.mxu0 0.0
        %463 = vmatpush1.msra.mxu0 0.0
        %464 = vmatprep.subr.mxu0 0.0
        %465 = vmatpush1.msra.mxu0 0.0
        %466 = vmatprep.subr.mxu0 0.0
        %467 = vmatpush1.msra.mxu0 0.0
        %468 = vmatprep.subr.mxu0 0.0
        %469 = vmatpush1.msra.mxu0 0.0
        %470 = vmatprep.subr.mxu0 0.0
        %471 = vmatpush1.msra.mxu0 0.0
        %472 = vmatprep.subr.mxu0 0.0
        %473 = vmatpush1.msra.mxu0 0.0
        %474 = vmatprep.subr.mxu0 0.0
        %475 = vmatpush1.msra.mxu0 0.0
        %476 = vmatprep.subr.mxu0 0.0
        %477 = vmatpush1.msra.mxu0 0.0
        %478 = vmatprep.subr.mxu0 0.0
        %479 = vmatpush1.msra.mxu0 0.0
        %480 = vmatprep.subr.mxu0 0.0
        %481 = vmatpush1.msra.mxu0 0.0
        %482 = vmatprep.subr.mxu0 0.0
        %483 = vmatpush1.msra.mxu0 0.0
        %484 = vmatprep.subr.mxu0 0.0
        %485 = vmatpush1.msra.mxu0 0.0
        %486 = vmatprep.subr.mxu0 0.0
        %487 = vmatpush1.msra.mxu0 0.0
        %488 = vmatprep.subr.mxu0 0.0
        %489 = vmatpush1.msra.mxu0 0.0
        %490 = vmatprep.subr.mxu0 0.0
        %491 = vmatpush1.msra.mxu0 0.0
        %492 = vmatprep.subr.mxu0 0.0
        %493 = vmatpush1.msra.mxu0 0.0
        %494 = vmatprep.subr.mxu0 0.0
        %495 = vmatpush1.msra.mxu0 0.0
        %496 = vmatprep.subr.mxu0 0.0
        %497 = vmatpush1.msra.mxu0 0.0
        %498 = vmatprep.subr.mxu0 0.0
        %499 = vmatpush1.msra.mxu0 0.0
        %500 = vmatprep.subr.mxu0 0.0
        %501 = vmatpush1.msra.mxu0 0.0
        %502 = vmatprep.subr.mxu0 0.0
        %503 = vmatpush1.msra.mxu0 0.0
        %504 = vmatprep.subr.mxu0 0.0
        %505 = vmatpush1.msra.mxu0 0.0
        %506 = vmatprep.subr.mxu0 0.0
        %507 = vmatpush1.msra.mxu0 0.0
        %508 = vmatprep.mubr.f32.mxu0 0.0
        %509 = vmatmul.mubr.f32.gmra.mrb[0].mxu0 %v421
        %v510 = vpop.f32.mrb[0].mxu0
        %v511 = vadd.f32 %v382, %v510
        %v512 = vpop.f32.mrb[0].mxu0
        %v513 = vadd.f32 %v382, %v512
        %514 = vmatprep.mubr.f32.mxu0 0.0
        %515 = vmatmul.mubr.f32.gmra.mrb[0].mxu0 %v424
        %v516 = vpop.f32.mrb[0].mxu0
        %v517 = vadd.f32 %v387, %v516
        %v518 = vpop.f32.mrb[0].mxu0
        %v519 = vadd.f32 %v387, %v518
        %520 = vmatprep.mubr.f32.mxu0 0.0
        %521 = vmatmul.mubr.f32.gmra.mrb[0].mxu0 %v427
        %v522 = vpop.f32.mrb[0].mxu0
        %v523 = vadd.f32 %v392, %v522
        %v524 = vpop.f32.mrb[0].mxu0
        %v525 = vadd.f32 %v392, %v524
        %526 = vmatprep.mubr.f32.mxu0 0.0
        %527 = vmatmul.mubr.f32.gmra.mrb[0].mxu0 %v430
        %v528 = vpop.f32.mrb[0].mxu0
        %v529 = vadd.f32 %v397, %v528
        %v530 = vpop.f32.mrb[0].mxu0
        %v531 = vadd.f32 %v397, %v530
        %532 = vmatprep.mubr.f32.mxu0 0.0
        %533 = vmatmul.mubr.f32.gmra.mrb[0].mxu0 %v433
        %v534 = vpop.f32.mrb[0].mxu0
        %v535 = vadd.f32 %v402, %v534
        %v536 = vpop.f32.mrb[0].mxu0
        %v537 = vadd.f32 %v402, %v536
        %538 = vmatprep.mubr.f32.mxu0 0.0
        %539 = vmatmul.mubr.f32.gmra.mrb[0].mxu0 %v436
        %v540 = vpop.f32.mrb[0].mxu0
        %v541 = vadd.f32 %v407, %v540
        %v542 = vpop.f32.mrb[0].mxu0
        %v543 = vadd.f32 %v407, %v542
        %544 = vmatprep.mubr.f32.mxu0 0.0
        %545 = vmatmul.mubr.f32.gmra.mrb[0].mxu0 %v439
        %v546 = vpop.f32.mrb[0].mxu0
        %v547 = vadd.f32 %v412, %v546
        %v548 = vpop.f32.mrb[0].mxu0
        %v549 = vadd.f32 %v412, %v548
        %550 = vmatprep.mubr.f32.mxu0 0.0
        %551 = vmatmul.mubr.f32.gmra.mrb[0].mxu0 %v442
        %v552 = vpop.f32.mrb[0].mxu0
        %v553 = vadd.f32 %v417, %v552
        %v554 = vpop.f32.mrb[0].mxu0
        %v555 = vadd.f32 %v417, %v554
        %556 = vdwg.mxu0
        %v557 = vmax.f32 %v511, 0.0
        %v558 = vmax.f32 %v513, 0.0
        %v559 = vmax.f32 %v517, 0.0
        %v560 = vmax.f32 %v519, 0.0
        %v561 = vmax.f32 %v523, 0.0
        %v562 = vmax.f32 %v525, 0.0
        %v563 = vmax.f32 %v529, 0.0
        %v564 = vmax.f32 %v531, 0.0
        %v565 = vmax.f32 %v535, 0.0
        %v566 = vmax.f32 %v537, 0.0
        %v567 = vmax.f32 %v541, 0.0
        %v568 = vmax.f32 %v543, 0.0
        %v569 = vmax.f32 %v547, 0.0
        %v570 = vmax.f32 %v549, 0.0
        %v571 = vmax.f32 %v553, 0.0
        %v572 = vmax.f32 %v555, 0.0
        %v573 = vld [vmem:[%s3] sm:$0xff]
        %v574 = vld [vmem:[%s3 + $0x8] sm:$0xff]
        %v575 = vld [vmem:[%s3 + $0x10] sm:$0xff]
        %v576 = vld [vmem:[%s3 + $0x18] sm:$0xff]
        %v577 = vld [vmem:[%s3 + $0x20] sm:$0xff]
        %v578 = vld [vmem:[%s3 + $0x28] sm:$0xff]
        %v579 = vld [vmem:[%s3 + $0x30] sm:$0xff]
        %v580 = vld [vmem:[%s3 + $0x38] sm:$0xff]
        %v581 = vld [vmem:[%s3 + $0x40] sm:$0xff]
        %v582 = vld [vmem:[%s3 + $0x48] sm:$0xff]
        %v583 = vld [vmem:[%s3 + $0x50] sm:$0xff]
        %v584 = vld [vmem:[%s3 + $0x58] sm:$0xff]
        %v585 = vld [vmem:[%s3 + $0x60] sm:$0xff]
        %v586 = vld [vmem:[%s3 + $0x68] sm:$0xff]
        %v587 = vld [vmem:[%s3 + $0x70] sm:$0xff]
        %v588 = vld [vmem:[%s3 + $0x78] sm:$0xff]
        %v589 = vld [vmem:[%s4] sm:$0xff]
        %v590 = vld [vmem:[%s4 + $0x8] sm:$0xff]
        %v591 = vld [vmem:[%s4 + $0x10] sm:$0xff]
        %v592 = vld [vmem:[%s4 + $0x18] sm:$0xff]
        %v593 = vld [vmem:[%s4 + $0x20] sm:$0xff]
        %v594 = vld [vmem:[%s4 + $0x28] sm:$0xff]
        %v595 = vld [vmem:[%s4 + $0x30] sm:$0xff]
        %v596 = vld [vmem:[%s4 + $0x38] sm:$0xff]
        %v597 = vld [vmem:[%s4 + $0x40] sm:$0xff]
        %v598 = vld [vmem:[%s4 + $0x48] sm:$0xff]
        %v599 = vld [vmem:[%s4 + $0x50] sm:$0xff]
        %v600 = vld [vmem:[%s4 + $0x58] sm:$0xff]
        %v601 = vld [vmem:[%s4 + $0x60] sm:$0xff]
        %v602 = vld [vmem:[%s4 + $0x68] sm:$0xff]
        %v603 = vld [vmem:[%s4 + $0x70] sm:$0xff]
        %v604 = vld [vmem:[%s4 + $0x78] sm:$0xff]
        %606 = vset.pattern.permute.xlu0 0
        %607 = vperm.xlu0 %606, %v589
        %v608 = vpop.permute.xlu0 %607
        %611 = vset.pattern.permute.xlu0 0
        %612 = vperm.xlu0 %611, %v590
        %v613 = vpop.permute.xlu0 %612
        %616 = vset.pattern.permute.xlu0 0
        %617 = vperm.xlu0 %616, %v591
        %v618 = vpop.permute.xlu0 %617
        %621 = vset.pattern.permute.xlu0 0
        %622 = vperm.xlu0 %621, %v592
        %v623 = vpop.permute.xlu0 %622
        %626 = vset.pattern.permute.xlu0 0
        %627 = vperm.xlu0 %626, %v593
        %v628 = vpop.permute.xlu0 %627
        %631 = vset.pattern.permute.xlu0 0
        %632 = vperm.xlu0 %631, %v594
        %v633 = vpop.permute.xlu0 %632
        %636 = vset.pattern.permute.xlu0 0
        %637 = vperm.xlu0 %636, %v595
        %v638 = vpop.permute.xlu0 %637
        %641 = vset.pattern.permute.xlu0 0
        %642 = vperm.xlu0 %641, %v596
        %v643 = vpop.permute.xlu0 %642
        %646 = vset.pattern.permute.xlu0 0
        %647 = vperm.xlu0 %646, %v597
        %v648 = vpop.permute.xlu0 %647
        %651 = vset.pattern.permute.xlu0 0
        %652 = vperm.xlu0 %651, %v598
        %v653 = vpop.permute.xlu0 %652
        %656 = vset.pattern.permute.xlu0 0
        %657 = vperm.xlu0 %656, %v599
        %v658 = vpop.permute.xlu0 %657
        %661 = vset.pattern.permute.xlu0 0
        %662 = vperm.xlu0 %661, %v600
        %v663 = vpop.permute.xlu0 %662
        %666 = vset.pattern.permute.xlu0 0
        %667 = vperm.xlu0 %666, %v601
        %v668 = vpop.permute.xlu0 %667
        %671 = vset.pattern.permute.xlu0 0
        %672 = vperm.xlu0 %671, %v602
        %v673 = vpop.permute.xlu0 %672
        %676 = vset.pattern.permute.xlu0 0
        %677 = vperm.xlu0 %676, %v603
        %v678 = vpop.permute.xlu0 %677
        %681 = vset.pattern.permute.xlu0 0
        %682 = vperm.xlu0 %681, %v604
        %v683 = vpop.permute.xlu0 %682
        %vm685 = vcmask 523264
        %v687 = vsel %vm685, %v573, 0
        %v690 = vsel %vm685, %v574, 0
        %v693 = vsel %vm685, %v575, 0
        %v696 = vsel %vm685, %v576, 0
        %v699 = vsel %vm685, %v577, 0
        %v702 = vsel %vm685, %v578, 0
        %v705 = vsel %vm685, %v579, 0
        %v708 = vsel %vm685, %v580, 0
        %v711 = vsel %vm685, %v581, 0
        %v714 = vsel %vm685, %v582, 0
        %v717 = vsel %vm685, %v583, 0
        %v720 = vsel %vm685, %v584, 0
        %v723 = vsel %vm685, %v585, 0
        %v726 = vsel %vm685, %v586, 0
        %v729 = vsel %vm685, %v587, 0
        %v732 = vsel %vm685, %v588, 0
        %734 = vmatprep.subr.mxu0 %v558
        %735 = vmatpush1.msra.mxu0 %v557
        %736 = vmatprep.subr.mxu0 %v560
        %737 = vmatpush1.msra.mxu0 %v559
        %738 = vmatprep.subr.mxu0 %v562
        %739 = vmatpush1.msra.mxu0 %v561
        %740 = vmatprep.subr.mxu0 %v564
        %741 = vmatpush1.msra.mxu0 %v563
        %742 = vmatprep.subr.mxu0 %v566
        %743 = vmatpush1.msra.mxu0 %v565
        %744 = vmatprep.subr.mxu0 %v568
        %745 = vmatpush1.msra.mxu0 %v567
        %746 = vmatprep.subr.mxu0 %v570
        %747 = vmatpush1.msra.mxu0 %v569
        %748 = vmatprep.subr.mxu0 %v572
        %749 = vmatpush1.msra.mxu0 %v571
        %750 = vmatprep.subr.mxu0 0.0
        %751 = vmatpush1.msra.mxu0 0.0
        %752 = vmatprep.subr.mxu0 0.0
        %753 = vmatpush1.msra.mxu0 0.0
        %754 = vmatprep.subr.mxu0 0.0
        %755 = vmatpush1.msra.mxu0 0.0
        %756 = vmatprep.subr.mxu0 0.0
        %757 = vmatpush1.msra.mxu0 0.0
        %758 = vmatprep.subr.mxu0 0.0
        %759 = vmatpush1.msra.mxu0 0.0
        %760 = vmatprep.subr.mxu0 0.0
        %761 = vmatpush1.msra.mxu0 0.0
        %762 = vmatprep.subr.mxu0 0.0
        %763 = vmatpush1.msra.mxu0 0.0
        %764 = vmatprep.subr.mxu0 0.0
        %765 = vmatpush1.msra.mxu0 0.0
        %766 = vmatprep.subr.mxu0 0.0
        %767 = vmatpush1.msra.mxu0 0.0
        %768 = vmatprep.subr.mxu0 0.0
        %769 = vmatpush1.msra.mxu0 0.0
        %770 = vmatprep.subr.mxu0 0.0
        %771 = vmatpush1.msra.mxu0 0.0
        %772 = vmatprep.subr.mxu0 0.0
        %773 = vmatpush1.msra.mxu0 0.0
        %774 = vmatprep.subr.mxu0 0.0
        %775 = vmatpush1.msra.mxu0 0.0
        %776 = vmatprep.subr.mxu0 0.0
        %777 = vmatpush1.msra.mxu0 0.0
        %778 = vmatprep.subr.mxu0 0.0
        %779 = vmatpush1.msra.mxu0 0.0
        %780 = vmatprep.subr.mxu0 0.0
        %781 = vmatpush1.msra.mxu0 0.0
        %782 = vmatprep.subr.mxu0 0.0
        %783 = vmatpush1.msra.mxu0 0.0
        %784 = vmatprep.subr.mxu0 0.0
        %785 = vmatpush1.msra.mxu0 0.0
        %786 = vmatprep.subr.mxu0 0.0
        %787 = vmatpush1.msra.mxu0 0.0
        %788 = vmatprep.subr.mxu0 0.0
        %789 = vmatpush1.msra.mxu0 0.0
        %790 = vmatprep.subr.mxu0 0.0
        %791 = vmatpush1.msra.mxu0 0.0
        %792 = vmatprep.subr.mxu0 0.0
        %793 = vmatpush1.msra.mxu0 0.0
        %794 = vmatprep.subr.mxu0 0.0
        %795 = vmatpush1.msra.mxu0 0.0
        %796 = vmatprep.subr.mxu0 0.0
        %797 = vmatpush1.msra.mxu0 0.0
        %798 = vmatprep.mubr.f32.mxu0 0.0
        %799 = vmatmul.mubr.f32.gmra.mrb[0].mxu0 %v687
        %v800 = vpop.f32.mrb[0].mxu0
        %v801 = vadd.f32 %v608, %v800
        %v802 = vpop.f32.mrb[0].mxu0
        %v803 = vadd.f32 %v608, %v802
        %804 = vmatprep.mubr.f32.mxu0 0.0
        %805 = vmatmul.mubr.f32.gmra.mrb[0].mxu0 %v690
        %v806 = vpop.f32.mrb[0].mxu0
        %v807 = vadd.f32 %v613, %v806
        %v808 = vpop.f32.mrb[0].mxu0
        %v809 = vadd.f32 %v613, %v808
        %810 = vmatprep.mubr.f32.mxu0 0.0
        %811 = vmatmul.mubr.f32.gmra.mrb[0].mxu0 %v693
        %v812 = vpop.f32.mrb[0].mxu0
        %v813 = vadd.f32 %v618, %v812
        %v814 = vpop.f32.mrb[0].mxu0
        %v815 = vadd.f32 %v618, %v814
        %816 = vmatprep.mubr.f32.mxu0 0.0
        %817 = vmatmul.mubr.f32.gmra.mrb[0].mxu0 %v696
        %v818 = vpop.f32.mrb[0].mxu0
        %v819 = vadd.f32 %v623, %v818
        %v820 = vpop.f32.mrb[0].mxu0
        %v821 = vadd.f32 %v623, %v820
        %822 = vmatprep.mubr.f32.mxu0 0.0
        %823 = vmatmul.mubr.f32.gmra.mrb[0].mxu0 %v699
        %v824 = vpop.f32.mrb[0].mxu0
        %v825 = vadd.f32 %v628, %v824
        %v826 = vpop.f32.mrb[0].mxu0
        %v827 = vadd.f32 %v628, %v826
        %828 = vmatprep.mubr.f32.mxu0 0.0
        %829 = vmatmul.mubr.f32.gmra.mrb[0].mxu0 %v702
        %v830 = vpop.f32.mrb[0].mxu0
        %v831 = vadd.f32 %v633, %v830
        %v832 = vpop.f32.mrb[0].mxu0
        %v833 = vadd.f32 %v633, %v832
        %834 = vmatprep.mubr.f32.mxu0 0.0
        %835 = vmatmul.mubr.f32.gmra.mrb[0].mxu0 %v705
        %v836 = vpop.f32.mrb[0].mxu0
        %v837 = vadd.f32 %v638, %v836
        %v838 = vpop.f32.mrb[0].mxu0
        %v839 = vadd.f32 %v638, %v838
        %840 = vmatprep.mubr.f32.mxu0 0.0
        %841 = vmatmul.mubr.f32.gmra.mrb[0].mxu0 %v708
        %v842 = vpop.f32.mrb[0].mxu0
        %v843 = vadd.f32 %v643, %v842
        %v844 = vpop.f32.mrb[0].mxu0
        %v845 = vadd.f32 %v643, %v844
        %846 = vmatprep.mubr.f32.mxu0 0.0
        %847 = vmatmul.mubr.f32.gmra.mrb[0].mxu0 %v711
        %v848 = vpop.f32.mrb[0].mxu0
        %v849 = vadd.f32 %v648, %v848
        %v850 = vpop.f32.mrb[0].mxu0
        %v851 = vadd.f32 %v648, %v850
        %852 = vmatprep.mubr.f32.mxu0 0.0
        %853 = vmatmul.mubr.f32.gmra.mrb[0].mxu0 %v714
        %v854 = vpop.f32.mrb[0].mxu0
        %v855 = vadd.f32 %v653, %v854
        %v856 = vpop.f32.mrb[0].mxu0
        %v857 = vadd.f32 %v653, %v856
        %858 = vmatprep.mubr.f32.mxu0 0.0
        %859 = vmatmul.mubr.f32.gmra.mrb[0].mxu0 %v717
        %v860 = vpop.f32.mrb[0].mxu0
        %v861 = vadd.f32 %v658, %v860
        %v862 = vpop.f32.mrb[0].mxu0
        %v863 = vadd.f32 %v658, %v862
        %864 = vmatprep.mubr.f32.mxu0 0.0
        %865 = vmatmul.mubr.f32.gmra.mrb[0].mxu0 %v720
        %v866 = vpop.f32.mrb[0].mxu0
        %v867 = vadd.f32 %v663, %v866
        %v868 = vpop.f32.mrb[0].mxu0
        %v869 = vadd.f32 %v663, %v868
        %870 = vmatprep.mubr.f32.mxu0 0.0
        %871 = vmatmul.mubr.f32.gmra.mrb[0].mxu0 %v723
        %v872 = vpop.f32.mrb[0].mxu0
        %v873 = vadd.f32 %v668, %v872
        %v874 = vpop.f32.mrb[0].mxu0
        %v875 = vadd.f32 %v668, %v874
        %876 = vmatprep.mubr.f32.mxu0 0.0
        %877 = vmatmul.mubr.f32.gmra.mrb[0].mxu0 %v726
        %v878 = vpop.f32.mrb[0].mxu0
        %v879 = vadd.f32 %v673, %v878
        %v880 = vpop.f32.mrb[0].mxu0
        %v881 = vadd.f32 %v673, %v880
        %882 = vmatprep.mubr.f32.mxu0 0.0
        %883 = vmatmul.mubr.f32.gmra.mrb[0].mxu0 %v729
        %v884 = vpop.f32.mrb[0].mxu0
        %v885 = vadd.f32 %v678, %v884
        %v886 = vpop.f32.mrb[0].mxu0
        %v887 = vadd.f32 %v678, %v886
        %888 = vmatprep.mubr.f32.mxu0 0.0
        %889 = vmatmul.mubr.f32.gmra.mrb[0].mxu0 %v732
        %v890 = vpop.f32.mrb[0].mxu0
        %v891 = vadd.f32 %v683, %v890
        %v892 = vpop.f32.mrb[0].mxu0
        %v893 = vadd.f32 %v683, %v892
        %894 = vdwg.mxu0
        %v895 = vmax.f32 %v801, 0.0
        %v896 = vmax.f32 %v803, 0.0
        %v897 = vmax.f32 %v807, 0.0
        %v898 = vmax.f32 %v809, 0.0
        %v899 = vmax.f32 %v813, 0.0
        %v900 = vmax.f32 %v815, 0.0
        %v901 = vmax.f32 %v819, 0.0
        %v902 = vmax.f32 %v821, 0.0
        %v903 = vmax.f32 %v825, 0.0
        %v904 = vmax.f32 %v827, 0.0
        %v905 = vmax.f32 %v831, 0.0
        %v906 = vmax.f32 %v833, 0.0
        %v907 = vmax.f32 %v837, 0.0
        %v908 = vmax.f32 %v839, 0.0
        %v909 = vmax.f32 %v843, 0.0
        %v910 = vmax.f32 %v845, 0.0
        %v911 = vmax.f32 %v849, 0.0
        %v912 = vmax.f32 %v851, 0.0
        %v913 = vmax.f32 %v855, 0.0
        %v914 = vmax.f32 %v857, 0.0
        %v915 = vmax.f32 %v861, 0.0
        %v916 = vmax.f32 %v863, 0.0
        %v917 = vmax.f32 %v867, 0.0
        %v918 = vmax.f32 %v869, 0.0
        %v919 = vmax.f32 %v873, 0.0
        %v920 = vmax.f32 %v875, 0.0
        %v921 = vmax.f32 %v879, 0.0
        %v922 = vmax.f32 %v881, 0.0
        %v923 = vmax.f32 %v885, 0.0
        %v924 = vmax.f32 %v887, 0.0
        %v925 = vmax.f32 %v891, 0.0
        %v926 = vmax.f32 %v893, 0.0
        %v927 = vld [vmem:[%s5] sm:$0xff]
        %v928 = vld [vmem:[%s5 + $0x8] sm:$0xff]
        %v929 = vld [vmem:[%s6] sm:$0xff]
        %v930 = vld [vmem:[%s6 + $0x8] sm:$0xff]
        %932 = vset.pattern.permute.xlu0 0
        %933 = vperm.xlu0 %932, %v929
        %v934 = vpop.permute.xlu0 %933
        %937 = vset.pattern.permute.xlu0 0
        %938 = vperm.xlu0 %937, %v930
        %v939 = vpop.permute.xlu0 %938
        %941 = vmatprep.subr.mxu0 %v896
        %942 = vmatpush1.msra.mxu0 %v895
        %943 = vmatprep.subr.mxu0 %v898
        %944 = vmatpush1.msra.mxu0 %v897
        %945 = vmatprep.subr.mxu0 %v900
        %946 = vmatpush1.msra.mxu0 %v899
        %947 = vmatprep.subr.mxu0 %v902
        %948 = vmatpush1.msra.mxu0 %v901
        %949 = vmatprep.subr.mxu0 %v904
        %950 = vmatpush1.msra.mxu0 %v903
        %951 = vmatprep.subr.mxu0 %v906
        %952 = vmatpush1.msra.mxu0 %v905
        %953 = vmatprep.subr.mxu0 %v908
        %954 = vmatpush1.msra.mxu0 %v907
        %955 = vmatprep.subr.mxu0 %v910
        %956 = vmatpush1.msra.mxu0 %v909
        %957 = vmatprep.subr.mxu0 %v912
        %958 = vmatpush1.msra.mxu0 %v911
        %959 = vmatprep.subr.mxu0 %v914
        %960 = vmatpush1.msra.mxu0 %v913
        %961 = vmatprep.subr.mxu0 %v916
        %962 = vmatpush1.msra.mxu0 %v915
        %963 = vmatprep.subr.mxu0 %v918
        %964 = vmatpush1.msra.mxu0 %v917
        %965 = vmatprep.subr.mxu0 %v920
        %966 = vmatpush1.msra.mxu0 %v919
        %967 = vmatprep.subr.mxu0 %v922
        %968 = vmatpush1.msra.mxu0 %v921
        %969 = vmatprep.subr.mxu0 %v924
        %970 = vmatpush1.msra.mxu0 %v923
        %971 = vmatprep.subr.mxu0 %v926
        %972 = vmatpush1.msra.mxu0 %v925
        %973 = vmatprep.subr.mxu0 0.0
        %974 = vmatpush1.msra.mxu0 0.0
        %975 = vmatprep.subr.mxu0 0.0
        %976 = vmatpush1.msra.mxu0 0.0
        %977 = vmatprep.subr.mxu0 0.0
        %978 = vmatpush1.msra.mxu0 0.0
        %979 = vmatprep.subr.mxu0 0.0
        %980 = vmatpush1.msra.mxu0 0.0
        %981 = vmatprep.subr.mxu0 0.0
        %982 = vmatpush1.msra.mxu0 0.0
        %983 = vmatprep.subr.mxu0 0.0
        %984 = vmatpush1.msra.mxu0 0.0
        %985 = vmatprep.subr.mxu0 0.0
        %986 = vmatpush1.msra.mxu0 0.0
        %987 = vmatprep.subr.mxu0 0.0
        %988 = vmatpush1.msra.mxu0 0.0
        %989 = vmatprep.subr.mxu0 0.0
        %990 = vmatpush1.msra.mxu0 0.0
        %991 = vmatprep.subr.mxu0 0.0
        %992 = vmatpush1.msra.mxu0 0.0
        %993 = vmatprep.subr.mxu0 0.0
        %994 = vmatpush1.msra.mxu0 0.0
        %995 = vmatprep.subr.mxu0 0.0
        %996 = vmatpush1.msra.mxu0 0.0
        %997 = vmatprep.subr.mxu0 0.0
        %998 = vmatpush1.msra.mxu0 0.0
        %999 = vmatprep.subr.mxu0 0.0
        %1000 = vmatpush1.msra.mxu0 0.0
        %1001 = vmatprep.subr.mxu0 0.0
        %1002 = vmatpush1.msra.mxu0 0.0
        %1003 = vmatprep.subr.mxu0 0.0
        %1004 = vmatpush1.msra.mxu0 0.0
        %1005 = vmatprep.mubr.f32.mxu0 0.0
        %1006 = vmatmul.mubr.f32.gmra.mrb[0].mxu0 %v927
        %v1007 = vpop.f32.mrb[0].mxu0
        %v1008 = vadd.f32 %v934, %v1007
        %v1009 = vpop.f32.mrb[0].mxu0
        %v1010 = vadd.f32 %v934, %v1009
        %1011 = vmatprep.mubr.f32.mxu0 0.0
        %1012 = vmatmul.mubr.f32.gmra.mrb[0].mxu0 %v928
        %v1013 = vpop.f32.mrb[0].mxu0
        %v1014 = vadd.f32 %v939, %v1013
        %v1015 = vpop.f32.mrb[0].mxu0
        %v1016 = vadd.f32 %v939, %v1015
        %1017 = vdwg.mxu0
        %v1018 = vld [vmem:[%s7] sm:$0xff]
        %v1019 = vld [vmem:[%s7 + $0x8] sm:$0xff]
        %v1020 = vld [vmem:[%s8] sm:$0xff]
        %v1021 = vld [vmem:[%s8 + $0x8] sm:$0xff]
        %v1022 = vmul.f32 %v1008, 0.5
        %v1023 = vmul.f32 %v1010, 0.5
        %v1024 = vmul.f32 %v1014, 0.5
        %v1025 = vmul.f32 %v1016, 0.5
        %v1026 = vtanh.pop %v1022
        %v1027 = vtanh.pop %v1023
        %v1028 = vtanh.pop %v1024
        %v1029 = vtanh.pop %v1025
        %1031 = vset.pattern.permute.xlu0 0
        %1032 = vperm.xlu0 %1031, %v1020
        %v1033 = vpop.permute.xlu0 %1032
        %1036 = vset.pattern.permute.xlu0 0
        %1037 = vperm.xlu0 %1036, %v1021
        %v1038 = vpop.permute.xlu0 %1037
        %v1040 = vmul.f32 %v1033, %v1026
        %v1041 = vmul.f32 %v1033, %v1027
        %v1042 = vmul.f32 %v1038, %v1028
        %v1043 = vmul.f32 %v1038, %v1029
        %1045 = vset.pattern.permute.xlu0 0
        %1046 = vperm.xlu0 %1045, %v1018
        %v1047 = vpop.permute.xlu0 %1046
        %1050 = vset.pattern.permute.xlu0 0
        %1051 = vperm.xlu0 %1050, %v1019
        %v1052 = vpop.permute.xlu0 %1051
        %v1054 = vadd.f32 %v1047, %v1040
        %v1055 = vadd.f32 %v1047, %v1041
        %v1056 = vadd.f32 %v1052, %v1042
        %v1057 = vadd.f32 %v1052, %v1043
        %1058 = vst [vmem:[%s356] sm:$0xff] %v1054
        %1059 = vst [vmem:[%s356 + $0x8] sm:$0xff] %v1055
        %1060 = vst [vmem:[%s356 + $0x10] sm:$0xff] %v1056
        %1061 = vst [vmem:[%s356 + $0x18] sm:$0xff] %v1057
        %s1062 = sand.u32 %s225, 1
        %s1063 = scalar_lea.sflag [#allocation4], %s1062
        %s1064 = sand.u32 %s225, 1
        %s1065 = smul.addr %s1064, 32
        %s1066 = scalar_lea.vmem [#allocation3], %s1065
        // Predicated region
        $region80: #{tpu_custom_call.1} parent=74 // pred_check
          %p1067 = pneg %p235
        $region81: #{tpu_custom_call.1} parent=74 // pred_check_branch
          %1069 = sbr.rel (%p1067) target = $region83
        $region82: #{tpu_custom_call.1} parent=74 // pred_region
          %s1070 = smul.u32 2, %s23
          %s1072 = ssub.s32 512, 512
          %1073 = vsyncadd %s1063, %s1072
          %s1074 = smul.addr %s1070, 128
          %s1075 = scalar_lea.hbm %s9, %s1074
          %s1076 = sshll.u32 %s1066, 4
          %s1077 = int_to_ptr.vmem [resolvable:$true] %s1076
          %1082 = dma.vmem_to_hbm [thread:$0]  %s1077, 512, %s1075, %s1063, 256, 512, 16
        $region83: #{tpu_custom_call.1} parent=74 // pred_fallthru
          _
      $region75: #{tpu_custom_call.1} parent=5 // pred_fallthru
        _
      %p1083 = scmp.le.s32.totalorder 2, %s18
      // Predicated region
      $region84: #{tpu_custom_call.1} parent=5 // pred_check
        %p1084 = pneg %p1083
      $region85: #{tpu_custom_call.1} parent=5 // pred_check_branch
        %1086 = sbr.rel (%p1084) target = $region87
      $region86: #{tpu_custom_call.1} parent=5 // pred_region
        %s1087 = ssub.s32 %s18, 2
        // Predicated region
        $region88: #{tpu_custom_call.1} parent=86 // pred_check
          %p1088 = pneg %p241
        $region89: #{tpu_custom_call.1} parent=86 // pred_check_branch
          %1090 = sbr.rel (%p1088) target = $region91
        $region90: #{tpu_custom_call.1} parent=86 // pred_region
          %s1091 = sand.u32 %s226, 1
          %s1092 = scalar_lea.sflag [#allocation4], %s1091
          %s1093 = sand.u32 %s226, 1
          %s1094 = smul.addr %s1093, 32
          %s1095 = scalar_lea.vmem [#allocation3], %s1094
          %1096 = dma.done %s1092, 512
        $region91: #{tpu_custom_call.1} parent=86 // pred_fallthru
          _
      $region87: #{tpu_custom_call.1} parent=5 // pred_fallthru
        _
    $region6: #{tpu_custom_call.1} parent=1 // loop_footer
      %s22 = sadd.s32 1, %s18
    $region7: #{tpu_custom_call.1} parent=1 // loop_footer_branch
      %17 = sbr.rel target = $region3
    $region8: #{tpu_custom_call.1} parent=1 // loop_exit
      _
    %1097 = vsyncpa [#allocation4], 1
    %s1098 = scalar_lea.sflag [#allocation4], 1
    %1099 = vsyncpa %s1098, 1

</llo_original>
